<compile_context>
chip_gen: v7x
topology: tpu7x:2x2x1
jax: 0.10.0
libtpu: 0.0.40
codegen_flags: <defaults>
</compile_context>

<pallas_src>
import jax
import jax.numpy as jnp
from jax import lax
from jax.experimental import pallas as pl
from jax.experimental.pallas import tpu as pltpu


NEG_SLOPE = 0.2


def _leaky_relu(h):
    return jnp.where(h > 0, h, NEG_SLOPE * h)


def mlp_disc_kernel(x_ref, w1t_ref, b1_ref, w2t_ref, b2_ref, w3_ref, out_ref):
    # Whole MLP fused per batch tile; batch mapped to lanes (transposed dataflow).
    x = x_ref[...]                                   # (bt, D)   (HBM-contiguous DMA)

    # Layer 1: h1^T = W1^T @ x^T  -> (H1, bt). Contract w1t dim 1 (D) with x dim 1 (D).
    h = lax.dot_general(
        w1t_ref[...], x,
        dimension_numbers=(((1,), (1,)), ((), ())),
        preferred_element_type=jnp.float32)          # (H1, bt)
    h = h + b1_ref[...]                              # (H1, 1) broadcast over lanes
    h = _leaky_relu(h)

    # Layer 2: (H2, H1) @ (H1, bt) -> (H2, bt)
    h = jnp.dot(w2t_ref[...], h, preferred_element_type=jnp.float32)
    h = h + b2_ref[...]                              # (H2, 1) broadcast over lanes
    h = _leaky_relu(h)

    # Layer 3 (out_dim = 1): VPU multiply + sublane (XLU) reduce instead of a 1-column
    # MXU matmul.  w3_ref is the (H2, 1) weight column.  Scalar bias b3 added in wrapper.
    o = jnp.sum(h * w3_ref[...], axis=0, keepdims=True)   # (1, bt) lane-dense
    out_ref[...] = o.astype(out_ref.dtype)


def distribution_discriminator(x, params, *, batch_tile=256):
    """x: (B, latent_dim) float32. Returns (B,) float32 (squeezed logits)."""
    w1, b1, w2, b2, w3, b3 = params
    B, D = x.shape
    H1 = w1.shape[1]
    H2 = w2.shape[1]
    assert batch_tile % 128 == 0, "batch_tile must be a multiple of 128 (lane width)"

    n_tiles = pl.cdiv(B, batch_tile)
    b_pad = n_tiles * batch_tile
    if b_pad != B:
        x = jnp.pad(x, ((0, b_pad - B), (0, 0)))     # padded rows are discarded below

    # Pre-transpose the tiny weights/biases in the wrapper (free) so the kernel runs with
    # batch in the lane dimension throughout.
    w1t = w1.T              # (H1, D)
    w2t = w2.T              # (H2, H1)
    b1c = b1.T              # (H1, 1)
    b2c = b2.T              # (H2, 1)
    w3c = w3                # (H2, 1)

    flops = 2 * b_pad * (D * H1 + H1 * H2 + H2)
    bytes_accessed = 4 * (b_pad * D + b_pad + D * H1 + H1 * H2 + H2 + H1 + H2)

    out = pl.pallas_call(
        mlp_disc_kernel,
        out_shape=jax.ShapeDtypeStruct((1, b_pad), jnp.float32),
        grid_spec=pltpu.PrefetchScalarGridSpec(
            num_scalar_prefetch=0,
            grid=(n_tiles,),
            in_specs=[
                pl.BlockSpec((batch_tile, D), lambda i: (i, 0)),   # x tile (contiguous)
                pl.BlockSpec((H1, D), lambda i: (0, 0)),           # W1^T (resident)
                pl.BlockSpec((H1, 1), lambda i: (0, 0)),           # b1 column
                pl.BlockSpec((H2, H1), lambda i: (0, 0)),          # W2^T
                pl.BlockSpec((H2, 1), lambda i: (0, 0)),           # b2 column
                pl.BlockSpec((H2, 1), lambda i: (0, 0)),           # w3 column
            ],
            out_specs=pl.BlockSpec((1, batch_tile), lambda i: (0, i)),  # lane-dense row
        ),
        compiler_params=pltpu.CompilerParams(
            dimension_semantics=("parallel",)),
        cost_estimate=pl.CostEstimate(
            flops=flops, transcendentals=0, bytes_accessed=bytes_accessed),
    )(x, w1t, b1c, w2t, b2c, w3c)

    # Fold the scalar output bias here (cheaper than a (1,1) VMEM block per grid step),
    # drop padded columns, and squeeze (B, 1)-equivalent -> (B,).
    return out[0, :B] + b3[0, 0]


def init_params(key, latent_dim, layer_dims):
    """Deterministic init for Linear layers: dims = [latent_dim] + layers + [1]."""
    dims = [latent_dim] + list(layer_dims) + [1]
    params = []
    for i in range(len(dims) - 1):
        key, kw, kb = jax.random.split(key, 3)
        fan_in = dims[i]
        scale = 1.0 / jnp.sqrt(fan_in)
        w = jax.random.uniform(kw, (dims[i], dims[i + 1]), jnp.float32, -scale, scale)
        b = jax.random.uniform(kb, (1, dims[i + 1]), jnp.float32, -scale, scale)
        params += [w, b]
    return tuple(params)


def reference_forward(x, params):
    w1, b1, w2, b2, w3, b3 = params
    h = x @ w1 + b1
    h = jnp.where(h > 0, h, NEG_SLOPE * h)
    h = h @ w2 + b2
    h = jnp.where(h > 0, h, NEG_SLOPE * h)
    o = h @ w3 + b3
    return jnp.squeeze(o, axis=-1)


if __name__ == "__main__":
    key = jax.random.PRNGKey(0)
    k_x, k_x2, k_p = jax.random.split(key, 3)

    LATENT_DIM = 32
    LAYERS = [64, 32]          # args['layers']; final MLP dims: [32, 64, 32, 1]
    params = init_params(k_p, LATENT_DIM, LAYERS)

    # Main case: B divisible by the tile; 2 grid steps (keeps both v7x TCs busy).
    B = 512
    x = jax.random.normal(k_x, (B, LATENT_DIM), jnp.float32)
    y = jax.block_until_ready(distribution_discriminator(x, params, batch_tile=256))
    y_ref = reference_forward(x, params)
    assert y.shape == (B,)
    assert jnp.allclose(y, y_ref, atol=1e-4, rtol=1e-5)

    # Ragged case: B not divisible by the tile (exercises pad + slice path).
    B2 = 200
    x2 = jax.random.normal(k_x2, (B2, LATENT_DIM), jnp.float32)
    y2 = jax.block_until_ready(distribution_discriminator(x2, params, batch_tile=256))
    y2_ref = reference_forward(x2, params)
    assert y2.shape == (B2,)
    assert jnp.allclose(y2, y2_ref, atol=1e-4, rtol=1e-5)

    print("KERNEL_OK")
</pallas_src>

<mosaic_0001>
module attributes {stable_mosaic.version = 11 : i64} {
  func.func @mlp_disc_kernel(%arg0: i32, %arg1: memref<256x32xf32, #tpu.memory_space<vmem>>, %arg2: memref<64x32xf32, #tpu.memory_space<vmem>>, %arg3: memref<64x1xf32, #tpu.memory_space<vmem>>, %arg4: memref<32x64xf32, #tpu.memory_space<vmem>>, %arg5: memref<32x1xf32, #tpu.memory_space<vmem>>, %arg6: memref<32x1xf32, #tpu.memory_space<vmem>>, %arg7: memref<1x256xf32, #tpu.memory_space<vmem>>) attributes {dimension_semantics = [#tpu.dimension_semantics<parallel>], iteration_bounds = array<i64: 2>, scalar_prefetch = 0 : i64, scratch_operands = 0 : i64, tpu.core_type = #tpu.core_type<tc>, window_params = [{transform_indices = @transform_0, window_bounds = array<i64: 256, 32>}, {pipeline_mode = #tpu.pipeline_mode<synchronous>, transform_indices = @transform_1, window_bounds = array<i64: 64, 32>}, {pipeline_mode = #tpu.pipeline_mode<synchronous>, transform_indices = @transform_2, window_bounds = array<i64: 64, 1>}, {pipeline_mode = #tpu.pipeline_mode<synchronous>, transform_indices = @transform_3, window_bounds = array<i64: 32, 64>}, {pipeline_mode = #tpu.pipeline_mode<synchronous>, transform_indices = @transform_4, window_bounds = array<i64: 32, 1>}, {pipeline_mode = #tpu.pipeline_mode<synchronous>, transform_indices = @transform_5, window_bounds = array<i64: 32, 1>}, {transform_indices = @transform_6, window_bounds = array<i64: 1, 256>}]} {
    %c0 = arith.constant 0 : index
    %c0_0 = arith.constant 0 : index
    %0 = vector.load %arg1[%c0, %c0_0] : memref<256x32xf32, #tpu.memory_space<vmem>>, vector<256x32xf32>
    %c0_1 = arith.constant 0 : index
    %c0_2 = arith.constant 0 : index
    %1 = vector.load %arg2[%c0_1, %c0_2] : memref<64x32xf32, #tpu.memory_space<vmem>>, vector<64x32xf32>
    %cst = arith.constant dense<0.000000e+00> : vector<64x256xf32>
    %2 = tpu.matmul %1, %0, %cst {dimension_numbers = #tpu.dot_dimension_numbers<[1], [1], [0], [0], [0, 0, 1, 0], [], []>} : vector<64x32xf32>, vector<256x32xf32>, vector<64x256xf32> -> vector<64x256xf32>
    %c0_3 = arith.constant 0 : index
    %c0_4 = arith.constant 0 : index
    %3 = vector.load %arg3[%c0_3, %c0_4] : memref<64x1xf32, #tpu.memory_space<vmem>>, vector<64x1xf32>
    %4 = vector.broadcast %3 : vector<64x1xf32> to vector<64x256xf32>
    %5 = arith.addf %2, %4 : vector<64x256xf32>
    %cst_5 = arith.constant 0.000000e+00 : f32
    %6 = vector.broadcast %cst_5 : f32 to vector<64x256xf32>
    %7 = arith.cmpf ogt, %5, %6 : vector<64x256xf32>
    %cst_6 = arith.constant 2.000000e-01 : f32
    %8 = vector.broadcast %cst_6 : f32 to vector<64x256xf32>
    %9 = arith.mulf %8, %5 : vector<64x256xf32>
    %10 = arith.select %7, %5, %9 : vector<64x256xi1>, vector<64x256xf32>
    %c0_7 = arith.constant 0 : index
    %c0_8 = arith.constant 0 : index
    %11 = vector.load %arg4[%c0_7, %c0_8] : memref<32x64xf32, #tpu.memory_space<vmem>>, vector<32x64xf32>
    %cst_9 = arith.constant dense<0.000000e+00> : vector<32x256xf32>
    %12 = tpu.matmul %11, %10, %cst_9 {dimension_numbers = #tpu.dot_dimension_numbers<[1], [0], [0], [1], [0, 0, 1, 1], [], []>} : vector<32x64xf32>, vector<64x256xf32>, vector<32x256xf32> -> vector<32x256xf32>
    %c0_10 = arith.constant 0 : index
    %c0_11 = arith.constant 0 : index
    %13 = vector.load %arg5[%c0_10, %c0_11] : memref<32x1xf32, #tpu.memory_space<vmem>>, vector<32x1xf32>
    %14 = vector.broadcast %13 : vector<32x1xf32> to vector<32x256xf32>
    %15 = arith.addf %12, %14 : vector<32x256xf32>
    %cst_12 = arith.constant 0.000000e+00 : f32
    %16 = vector.broadcast %cst_12 : f32 to vector<32x256xf32>
    %17 = arith.cmpf ogt, %15, %16 : vector<32x256xf32>
    %cst_13 = arith.constant 2.000000e-01 : f32
    %18 = vector.broadcast %cst_13 : f32 to vector<32x256xf32>
    %19 = arith.mulf %18, %15 : vector<32x256xf32>
    %20 = arith.select %17, %15, %19 : vector<32x256xi1>, vector<32x256xf32>
    %c0_14 = arith.constant 0 : index
    %c0_15 = arith.constant 0 : index
    %21 = vector.load %arg6[%c0_14, %c0_15] : memref<32x1xf32, #tpu.memory_space<vmem>>, vector<32x1xf32>
    %22 = vector.broadcast %21 : vector<32x1xf32> to vector<32x256xf32>
    %23 = arith.mulf %20, %22 : vector<32x256xf32>
    %cst_16 = arith.constant dense<0.000000e+00> : vector<256xf32>
    %24 = vector.multi_reduction <add>, %23, %cst_16 [0] : vector<32x256xf32> to vector<256xf32>
    %25 = vector.shape_cast %24 : vector<256xf32> to vector<1x256xf32>
    %c0_17 = arith.constant 0 : index
    %c0_18 = arith.constant 0 : index
    %26 = vector.load %arg7[%c0_17, %c0_18] : memref<1x256xf32, #tpu.memory_space<vmem>>, vector<1x256xf32>
    tpu.vector_store %arg7[%c0_17, %c0_18], %25 {strides = array<i32>} : memref<1x256xf32, #tpu.memory_space<vmem>>, vector<1x256xf32>,
    return
  }
  func.func @transform_0(%arg0: i32) -> (i32, i32) {
    %c0_i32 = arith.constant 0 : i32
    %c0_i32_0 = arith.constant 0 : i32
    return %arg0, %c0_i32 : i32, i32
  }
  func.func @transform_1(%arg0: i32) -> (i32, i32) {
    %c0_i32 = arith.constant 0 : i32
    %c0_i32_0 = arith.constant 0 : i32
    %c0_i32_1 = arith.constant 0 : i32
    return %c0_i32, %c0_i32_0 : i32, i32
  }
  func.func @transform_2(%arg0: i32) -> (i32, i32) {
    %c0_i32 = arith.constant 0 : i32
    %c0_i32_0 = arith.constant 0 : i32
    %c0_i32_1 = arith.constant 0 : i32
    return %c0_i32, %c0_i32_0 : i32, i32
  }
  func.func @transform_3(%arg0: i32) -> (i32, i32) {
    %c0_i32 = arith.constant 0 : i32
    %c0_i32_0 = arith.constant 0 : i32
    %c0_i32_1 = arith.constant 0 : i32
    return %c0_i32, %c0_i32_0 : i32, i32
  }
  func.func @transform_4(%arg0: i32) -> (i32, i32) {
    %c0_i32 = arith.constant 0 : i32
    %c0_i32_0 = arith.constant 0 : i32
    %c0_i32_1 = arith.constant 0 : i32
    return %c0_i32, %c0_i32_0 : i32, i32
  }
  func.func @transform_5(%arg0: i32) -> (i32, i32) {
    %c0_i32 = arith.constant 0 : i32
    %c0_i32_0 = arith.constant 0 : i32
    %c0_i32_1 = arith.constant 0 : i32
    return %c0_i32, %c0_i32_0 : i32, i32
  }
  func.func @transform_6(%arg0: i32) -> (i32, i32) {
    %c0_i32 = arith.constant 0 : i32
    %c0_i32_0 = arith.constant 0 : i32
    return %c0_i32, %arg0 : i32, i32
  }
}

</mosaic_0001>

<llo_original>
// kernel: tpu_custom_call.1
$region0: #{tpu_custom_call.1}
  #allocation0 [shape = 'u32[]', space=smem, size = 0x4, offset = 0x4, fixed_abs, tag = 'smem constant byte address 0x4 - core index']
  #allocation1 [shape = 'u32[144,128]{1,0:T(1,128)}', space=vmem, size = 0x12000, scoped, tag = 'internal scratch']
  %s0 = inlined_call_operand.vmem [shape: f32[512,32], index: 0, kind: input, shape index: {}]
  %s1 = inlined_call_operand.vmem [shape: f32[64,32], index: 1, kind: input, shape index: {}]
  %s2 = inlined_call_operand.vmem [shape: f32[64,1], index: 2, kind: input, shape index: {}]
  %s3 = inlined_call_operand.vmem [shape: f32[32,64], index: 3, kind: input, shape index: {}]
  %s4 = inlined_call_operand.vmem [shape: f32[32,1], index: 4, kind: input, shape index: {}]
  %s5 = inlined_call_operand.vmem [shape: f32[32,1], index: 5, kind: input, shape index: {}]
  %s6 = inlined_call_operand.hbm [shape: f32[1,512], index: 6, kind: output, shape index: {}]
  %s7 = sld [smem:[#allocation0]]
  $region57: #{tpu_custom_call.1} parent=0
    _
  %s9 = ssub.s32 1, %s7
  %s10 = scalar_select 0, %s9, %s7
  $region1: #{tpu_custom_call.1} parent=0
    #allocation2 [shape = 'u8[2048]{0}', space=vmem, size = 0x800, scoped, tag = 'output window, operand 0']
    #allocation3 [shape = 's32[2]{0}', space=sflag, size = 0x8, scoped, tag = 'scoped memory for tpu_custom_call.1']
    %11 = vsyncpa [#allocation3], 0
    %s12 = scalar_lea.sflag [#allocation3], 1
    %13 = vsyncpa %s12, 0
    loop: start=0, step=1, limit=4
    $region2: #{tpu_custom_call.1} parent=1 // loop_pre_header
      _
    $region3: #{tpu_custom_call.1} parent=1 // loop_header
      %s15 = sphi 0, %s19
      %p16 = scmp.ge.s32.totalorder %s15, 4
      %s25 = sphi 0, %s27
      %s28 = sphi 0, %s25
      %s29 = sphi 0, %s28
      %s45 = sphi 0, %s29
      %s49 = sphi 0, %s49
      %s51 = sphi 0, %s49
      %s52 = sphi 0, %s51
      %s66 = sphi 0, %s52
      %s70 = sphi 0, %s70
      %s72 = sphi 0, %s70
      %s73 = sphi 0, %s72
      %s87 = sphi 0, %s73
      %s91 = sphi 0, %s91
      %s93 = sphi 0, %s91
      %s94 = sphi 0, %s93
      %s108 = sphi 0, %s94
      %s112 = sphi 0, %s112
      %s114 = sphi 0, %s112
      %s115 = sphi 0, %s114
      %s129 = sphi 0, %s115
      %s133 = sphi 0, %s133
      %s135 = sphi 0, %s133
      %s136 = sphi 0, %s135
      %s150 = sphi 0, %s136
      %s156 = sphi 0, %s158
      %s159 = sphi 0, %s156
      %s160 = sphi 0, %s159
      %s176 = sphi 0, %s160
    $region4: #{tpu_custom_call.1} parent=1 // loop_header_branch
      %18 = sbr.rel (%p16) target = $region8
    $region5: #{tpu_custom_call.1} parent=1 // loop_body
      %s20 = ssub.s32 %s15, 1
      %s21 = ssub.s32 %s15, 2
      %s22 = sadd.s32 %s15, 1
      %s23 = ssub.s32 %s15, %s22
      %p24 = scmp.eq.s32.totalorder %s23, 0
      %s26 = sadd.s32 %s25, 1
      %s27 = scalar_select %p24, %s25, %s26
      %p30 = pneg %p24
      %p31 = scmp.eq.s32.totalorder %s15, 1
      %p32 = por %p30, %p31
      %p33 = scmp.ne.s32.totalorder %s25, %s28
      %p34 = scmp.eq.s32.totalorder %s15, 0
      %p35 = por %p33, %p34
      %p36 = scmp.ne.s32.totalorder %s25, %s28
      %p37 = scmp.eq.s32.totalorder %s20, 1
      %p38 = por %p36, %p37
      %p39 = scmp.ne.s32.totalorder %s28, %s29
      %p40 = scmp.eq.s32.totalorder %s20, 0
      %p41 = por %p39, %p40
      %p42 = scmp.ne.s32.totalorder %s28, %s29
      %p43 = scmp.eq.s32.totalorder %s21, 1
      %p44 = por %p42, %p43
      %p46 = scmp.ne.s32.totalorder %s29, %s45
      %p47 = scmp.eq.s32.totalorder %s21, 0
      %p48 = por %p46, %p47
      %s50 = sadd.s32 %s49, 1
      %p53 = scmp.eq.s32.totalorder %s15, 1
      %p54 = scmp.ne.s32.totalorder %s49, %s51
      %p55 = scmp.eq.s32.totalorder %s15, 0
      %p56 = por %p54, %p55
      %p57 = scmp.ne.s32.totalorder %s49, %s51
      %p58 = scmp.eq.s32.totalorder %s20, 1
      %p59 = por %p57, %p58
      %p60 = scmp.ne.s32.totalorder %s51, %s52
      %p61 = scmp.eq.s32.totalorder %s20, 0
      %p62 = por %p60, %p61
      %p63 = scmp.ne.s32.totalorder %s51, %s52
      %p64 = scmp.eq.s32.totalorder %s21, 1
      %p65 = por %p63, %p64
      %p67 = scmp.ne.s32.totalorder %s52, %s66
      %p68 = scmp.eq.s32.totalorder %s21, 0
      %p69 = por %p67, %p68
      %s71 = sadd.s32 %s70, 1
      %p74 = scmp.eq.s32.totalorder %s15, 1
      %p75 = scmp.ne.s32.totalorder %s70, %s72
      %p76 = scmp.eq.s32.totalorder %s15, 0
      %p77 = por %p75, %p76
      %p78 = scmp.ne.s32.totalorder %s70, %s72
      %p79 = scmp.eq.s32.totalorder %s20, 1
      %p80 = por %p78, %p79
      %p81 = scmp.ne.s32.totalorder %s72, %s73
      %p82 = scmp.eq.s32.totalorder %s20, 0
      %p83 = por %p81, %p82
      %p84 = scmp.ne.s32.totalorder %s72, %s73
      %p85 = scmp.eq.s32.totalorder %s21, 1
      %p86 = por %p84, %p85
      %p88 = scmp.ne.s32.totalorder %s73, %s87
      %p89 = scmp.eq.s32.totalorder %s21, 0
      %p90 = por %p88, %p89
      %s92 = sadd.s32 %s91, 1
      %p95 = scmp.eq.s32.totalorder %s15, 1
      %p96 = scmp.ne.s32.totalorder %s91, %s93
      %p97 = scmp.eq.s32.totalorder %s15, 0
      %p98 = por %p96, %p97
      %p99 = scmp.ne.s32.totalorder %s91, %s93
      %p100 = scmp.eq.s32.totalorder %s20, 1
      %p101 = por %p99, %p100
      %p102 = scmp.ne.s32.totalorder %s93, %s94
      %p103 = scmp.eq.s32.totalorder %s20, 0
      %p104 = por %p102, %p103
      %p105 = scmp.ne.s32.totalorder %s93, %s94
      %p106 = scmp.eq.s32.totalorder %s21, 1
      %p107 = por %p105, %p106
      %p109 = scmp.ne.s32.totalorder %s94, %s108
      %p110 = scmp.eq.s32.totalorder %s21, 0
      %p111 = por %p109, %p110
      %s113 = sadd.s32 %s112, 1
      %p116 = scmp.eq.s32.totalorder %s15, 1
      %p117 = scmp.ne.s32.totalorder %s112, %s114
      %p118 = scmp.eq.s32.totalorder %s15, 0
      %p119 = por %p117, %p118
      %p120 = scmp.ne.s32.totalorder %s112, %s114
      %p121 = scmp.eq.s32.totalorder %s20, 1
      %p122 = por %p120, %p121
      %p123 = scmp.ne.s32.totalorder %s114, %s115
      %p124 = scmp.eq.s32.totalorder %s20, 0
      %p125 = por %p123, %p124
      %p126 = scmp.ne.s32.totalorder %s114, %s115
      %p127 = scmp.eq.s32.totalorder %s21, 1
      %p128 = por %p126, %p127
      %p130 = scmp.ne.s32.totalorder %s115, %s129
      %p131 = scmp.eq.s32.totalorder %s21, 0
      %p132 = por %p130, %p131
      %s134 = sadd.s32 %s133, 1
      %p137 = scmp.eq.s32.totalorder %s15, 1
      %p138 = scmp.ne.s32.totalorder %s133, %s135
      %p139 = scmp.eq.s32.totalorder %s15, 0
      %p140 = por %p138, %p139
      %p141 = scmp.ne.s32.totalorder %s133, %s135
      %p142 = scmp.eq.s32.totalorder %s20, 1
      %p143 = por %p141, %p142
      %p144 = scmp.ne.s32.totalorder %s135, %s136
      %p145 = scmp.eq.s32.totalorder %s20, 0
      %p146 = por %p144, %p145
      %p147 = scmp.ne.s32.totalorder %s135, %s136
      %p148 = scmp.eq.s32.totalorder %s21, 1
      %p149 = por %p147, %p148
      %p151 = scmp.ne.s32.totalorder %s136, %s150
      %p152 = scmp.eq.s32.totalorder %s21, 0
      %p153 = por %p151, %p152
      %s154 = ssub.s32 %s15, %s22
      %p155 = scmp.eq.s32.totalorder %s154, 0
      %s157 = sadd.s32 %s156, 1
      %s158 = scalar_select %p155, %s156, %s157
      %p161 = pneg %p155
      %p162 = scmp.eq.s32.totalorder %s15, 1
      %p163 = por %p161, %p162
      %p164 = scmp.ne.s32.totalorder %s156, %s159
      %p165 = scmp.eq.s32.totalorder %s15, 0
      %p166 = por %p164, %p165
      %p167 = scmp.ne.s32.totalorder %s156, %s159
      %p168 = scmp.eq.s32.totalorder %s20, 1
      %p169 = por %p167, %p168
      %p170 = scmp.ne.s32.totalorder %s159, %s160
      %p171 = scmp.eq.s32.totalorder %s20, 0
      %p172 = por %p170, %p171
      %p173 = scmp.ne.s32.totalorder %s159, %s160
      %p174 = scmp.eq.s32.totalorder %s21, 1
      %p175 = por %p173, %p174
      %p177 = scmp.ne.s32.totalorder %s160, %s176
      %p178 = scmp.eq.s32.totalorder %s21, 0
      %p179 = por %p177, %p178
      %p180 = scmp.le.s32.totalorder 1, %s15
      %p181 = scmp.lt.s32.totalorder %s15, 3
      %p182 = pnand %p180, %p181
      %p183 = pneg %p182
      // Predicated region
      $region9: #{tpu_custom_call.1} parent=5 // pred_check
        _
      $region10: #{tpu_custom_call.1} parent=5 // pred_check_branch
        %185 = sbr.rel (%p182) target = $region12
      $region11: #{tpu_custom_call.1} parent=5 // pred_region
        %s186 = ssub.s32 %s15, 1
        // Predicated region
        $region13: #{tpu_custom_call.1} parent=11 // pred_check
          %p187 = pneg %p62
        $region14: #{tpu_custom_call.1} parent=11 // pred_check_branch
          %189 = sbr.rel (%p187) target = $region16
        $region15: #{tpu_custom_call.1} parent=11 // pred_region
          _
        $region16: #{tpu_custom_call.1} parent=11 // pred_fallthru
          _
        // Predicated region
        $region17: #{tpu_custom_call.1} parent=11 // pred_check
          %p190 = pneg %p83
        $region18: #{tpu_custom_call.1} parent=11 // pred_check_branch
          %192 = sbr.rel (%p190) target = $region20
        $region19: #{tpu_custom_call.1} parent=11 // pred_region
          _
        $region20: #{tpu_custom_call.1} parent=11 // pred_fallthru
          _
        // Predicated region
        $region21: #{tpu_custom_call.1} parent=11 // pred_check
          %p193 = pneg %p104
        $region22: #{tpu_custom_call.1} parent=11 // pred_check_branch
          %195 = sbr.rel (%p193) target = $region24
        $region23: #{tpu_custom_call.1} parent=11 // pred_region
          _
        $region24: #{tpu_custom_call.1} parent=11 // pred_fallthru
          _
        // Predicated region
        $region25: #{tpu_custom_call.1} parent=11 // pred_check
          %p196 = pneg %p125
        $region26: #{tpu_custom_call.1} parent=11 // pred_check_branch
          %198 = sbr.rel (%p196) target = $region28
        $region27: #{tpu_custom_call.1} parent=11 // pred_region
          _
        $region28: #{tpu_custom_call.1} parent=11 // pred_fallthru
          _
        // Predicated region
        $region29: #{tpu_custom_call.1} parent=11 // pred_check
          %p199 = pneg %p146
        $region30: #{tpu_custom_call.1} parent=11 // pred_check_branch
          %201 = sbr.rel (%p199) target = $region32
        $region31: #{tpu_custom_call.1} parent=11 // pred_region
          _
        $region32: #{tpu_custom_call.1} parent=11 // pred_fallthru
          _
      $region12: #{tpu_custom_call.1} parent=5 // pred_fallthru
        _
      %p202 = scmp.lt.s32.totalorder %s15, 2
      // Predicated region
      $region33: #{tpu_custom_call.1} parent=5 // pred_check
        %p203 = pneg %p202
      $region34: #{tpu_custom_call.1} parent=5 // pred_check_branch
        %205 = sbr.rel (%p203) target = $region36
      $region35: #{tpu_custom_call.1} parent=5 // pred_region
        // Predicated region
        $region37: #{tpu_custom_call.1} parent=35 // pred_check
          %p206 = pneg %p35
        $region38: #{tpu_custom_call.1} parent=35 // pred_check_branch
          %208 = sbr.rel (%p206) target = $region40
        $region39: #{tpu_custom_call.1} parent=35 // pred_region
          %s209 = smul.u32 32, %s15
          %p210 = scmp.lt.s32.totalorder %s209, 63
          %s211 = scalar_select %p210, %s209, 63
          %s212 = smul.addr %s211, 8
          %s213 = scalar_lea.vmem %s0, %s212
          %s214 = smul.u32 32, %s15
        $region40: #{tpu_custom_call.1} parent=35 // pred_fallthru
          _
      $region36: #{tpu_custom_call.1} parent=5 // pred_fallthru
        _
      %p215 = scmp.le.s32.totalorder 1, %s15
      %p216 = scmp.lt.s32.totalorder %s15, 3
      %p217 = pnand %p215, %p216
      %p218 = pneg %p217
      // Predicated region
      $region41: #{tpu_custom_call.1} parent=5 // pred_check
        _
      $region42: #{tpu_custom_call.1} parent=5 // pred_check_branch
        %220 = sbr.rel (%p217) target = $region44
      $region43: #{tpu_custom_call.1} parent=5 // pred_region
        %s221 = ssub.s32 %s15, 1
        %s222 = smul.u32 32, %s20
        %p223 = scmp.lt.s32.totalorder %s222, 63
        %s224 = scalar_select %p223, %s222, 63
        %s225 = smul.addr %s224, 8
        %s226 = scalar_lea.vmem %s0, %s225
        %p227 = pneg %p41
        %p228 = pneg %p38
        %p229 = pneg %p62
        %p230 = pneg %p59
        %p231 = pneg %p83
        %p232 = pneg %p80
        %p233 = pneg %p104
        %p234 = pneg %p101
        %p235 = pneg %p125
        %p236 = pneg %p122
        %p237 = pneg %p146
        %p238 = pneg %p143
        %p239 = pneg %p172
        %p240 = pneg %p169
        %s241 = sand.u32 %s159, 1
        %s242 = scalar_lea.sflag [#allocation3], %s241
        %s243 = sand.u32 %s159, 1
        %s244 = smul.addr %s243, 2
        %s245 = scalar_lea.vmem [#allocation2], %s244
        %s246 = smul.u32 32, %s20
        %p247 = scmp.lt.s32.totalorder %s246, 63
        %s248 = scalar_select %p247, %s246, 63
        %s249 = smul.addr %s248, 8
        %s250 = scalar_lea.vmem %s0, %s249
        %s251 = smul.u32 32, %s20
        %s252 = smul.u32 2, %s20
        %v253 = vld [vmem:[%s250] sm:$0xff]
        %v254 = vld [vmem:[%s250 + $0x8] sm:$0xff]
        %v255 = vld [vmem:[%s250 + $0x10] sm:$0xff]
        %v256 = vld [vmem:[%s250 + $0x18] sm:$0xff]
        %v257 = vld [vmem:[%s250 + $0x20] sm:$0xff]
        %v258 = vld [vmem:[%s250 + $0x28] sm:$0xff]
        %v259 = vld [vmem:[%s250 + $0x30] sm:$0xff]
        %v260 = vld [vmem:[%s250 + $0x38] sm:$0xff]
        %v261 = vld [vmem:[%s250 + $0x40] sm:$0xff]
        %v262 = vld [vmem:[%s250 + $0x48] sm:$0xff]
        %v263 = vld [vmem:[%s250 + $0x50] sm:$0xff]
        %v264 = vld [vmem:[%s250 + $0x58] sm:$0xff]
        %v265 = vld [vmem:[%s250 + $0x60] sm:$0xff]
        %v266 = vld [vmem:[%s250 + $0x68] sm:$0xff]
        %v267 = vld [vmem:[%s250 + $0x70] sm:$0xff]
        %v268 = vld [vmem:[%s250 + $0x78] sm:$0xff]
        %v269 = vld [vmem:[%s250 + $0x80] sm:$0xff]
        %v270 = vld [vmem:[%s250 + $0x88] sm:$0xff]
        %v271 = vld [vmem:[%s250 + $0x90] sm:$0xff]
        %v272 = vld [vmem:[%s250 + $0x98] sm:$0xff]
        %v273 = vld [vmem:[%s250 + $0xa0] sm:$0xff]
        %v274 = vld [vmem:[%s250 + $0xa8] sm:$0xff]
        %v275 = vld [vmem:[%s250 + $0xb0] sm:$0xff]
        %v276 = vld [vmem:[%s250 + $0xb8] sm:$0xff]
        %v277 = vld [vmem:[%s250 + $0xc0] sm:$0xff]
        %v278 = vld [vmem:[%s250 + $0xc8] sm:$0xff]
        %v279 = vld [vmem:[%s250 + $0xd0] sm:$0xff]
        %v280 = vld [vmem:[%s250 + $0xd8] sm:$0xff]
        %v281 = vld [vmem:[%s250 + $0xe0] sm:$0xff]
        %v282 = vld [vmem:[%s250 + $0xe8] sm:$0xff]
        %v283 = vld [vmem:[%s250 + $0xf0] sm:$0xff]
        %v284 = vld [vmem:[%s250 + $0xf8] sm:$0xff]
        %v285 = vld [vmem:[%s1] sm:$0xff]
        %v286 = vld [vmem:[%s1 + $0x8] sm:$0xff]
        %v287 = vld [vmem:[%s1 + $0x10] sm:$0xff]
        %v288 = vld [vmem:[%s1 + $0x18] sm:$0xff]
        %v289 = vld [vmem:[%s1 + $0x20] sm:$0xff]
        %v290 = vld [vmem:[%s1 + $0x28] sm:$0xff]
        %v291 = vld [vmem:[%s1 + $0x30] sm:$0xff]
        %v292 = vld [vmem:[%s1 + $0x38] sm:$0xff]
        %v293 = vld [vmem:[%s2] sm:$0xff]
        %v294 = vld [vmem:[%s2 + $0x8] sm:$0xff]
        %v295 = vld [vmem:[%s2 + $0x10] sm:$0xff]
        %v296 = vld [vmem:[%s2 + $0x18] sm:$0xff]
        %v297 = vld [vmem:[%s2 + $0x20] sm:$0xff]
        %v298 = vld [vmem:[%s2 + $0x28] sm:$0xff]
        %v299 = vld [vmem:[%s2 + $0x30] sm:$0xff]
        %v300 = vld [vmem:[%s2 + $0x38] sm:$0xff]
        %302 = vset.pattern.permute.xlu0 0
        %303 = vperm.xlu0 %302, %v293
        %v304 = vpop.permute.xlu0 %303
        %307 = vset.pattern.permute.xlu0 0
        %308 = vperm.xlu0 %307, %v294
        %v309 = vpop.permute.xlu0 %308
        %312 = vset.pattern.permute.xlu0 0
        %313 = vperm.xlu0 %312, %v295
        %v314 = vpop.permute.xlu0 %313
        %317 = vset.pattern.permute.xlu0 0
        %318 = vperm.xlu0 %317, %v296
        %v319 = vpop.permute.xlu0 %318
        %322 = vset.pattern.permute.xlu0 0
        %323 = vperm.xlu0 %322, %v297
        %v324 = vpop.permute.xlu0 %323
        %327 = vset.pattern.permute.xlu0 0
        %328 = vperm.xlu0 %327, %v298
        %v329 = vpop.permute.xlu0 %328
        %332 = vset.pattern.permute.xlu0 0
        %333 = vperm.xlu0 %332, %v299
        %v334 = vpop.permute.xlu0 %333
        %337 = vset.pattern.permute.xlu0 0
        %338 = vperm.xlu0 %337, %v300
        %v339 = vpop.permute.xlu0 %338
        %vm341 = vcmask 261120
        %v343 = vsel %vm341, %v285, 0
        %v346 = vsel %vm341, %v286, 0
        %v349 = vsel %vm341, %v287, 0
        %v352 = vsel %vm341, %v288, 0
        %v355 = vsel %vm341, %v289, 0
        %v358 = vsel %vm341, %v290, 0
        %v361 = vsel %vm341, %v291, 0
        %v364 = vsel %vm341, %v292, 0
        %v367 = vsel %vm341, %v253, 0
        %v370 = vsel %vm341, %v254, 0
        %v373 = vsel %vm341, %v255, 0
        %v376 = vsel %vm341, %v256, 0
        %v379 = vsel %vm341, %v257, 0
        %v382 = vsel %vm341, %v258, 0
        %v385 = vsel %vm341, %v259, 0
        %v388 = vsel %vm341, %v260, 0
        %v391 = vsel %vm341, %v261, 0
        %v394 = vsel %vm341, %v262, 0
        %v397 = vsel %vm341, %v263, 0
        %v400 = vsel %vm341, %v264, 0
        %v403 = vsel %vm341, %v265, 0
        %v406 = vsel %vm341, %v266, 0
        %v409 = vsel %vm341, %v267, 0
        %v412 = vsel %vm341, %v268, 0
        %v415 = vsel %vm341, %v269, 0
        %v418 = vsel %vm341, %v270, 0
        %v421 = vsel %vm341, %v271, 0
        %v424 = vsel %vm341, %v272, 0
        %v427 = vsel %vm341, %v273, 0
        %v430 = vsel %vm341, %v274, 0
        %v433 = vsel %vm341, %v275, 0
        %v436 = vsel %vm341, %v276, 0
        %v439 = vsel %vm341, %v277, 0
        %v442 = vsel %vm341, %v278, 0
        %v445 = vsel %vm341, %v279, 0
        %v448 = vsel %vm341, %v280, 0
        %v451 = vsel %vm341, %v281, 0
        %v454 = vsel %vm341, %v282, 0
        %v457 = vsel %vm341, %v283, 0
        %v460 = vsel %vm341, %v284, 0
        %462 = vmatprep.subr.mxu0 0.0
        %463 = vmatpush1.xpose.msra.mxu0 %v367
        %464 = vmatprep.subr.mxu0 0.0
        %465 = vmatpush1.xpose.msra.mxu0 %v370
        %466 = vmatprep.subr.mxu0 0.0
        %467 = vmatpush1.xpose.msra.mxu0 %v373
        %468 = vmatprep.subr.mxu0 0.0
        %469 = vmatpush1.xpose.msra.mxu0 %v376
        %470 = vmatprep.subr.mxu0 0.0
        %471 = vmatpush1.xpose.msra.mxu0 %v379
        %472 = vmatprep.subr.mxu0 0.0
        %473 = vmatpush1.xpose.msra.mxu0 %v382
        %474 = vmatprep.subr.mxu0 0.0
        %475 = vmatpush1.xpose.msra.mxu0 %v385
        %476 = vmatprep.subr.mxu0 0.0
        %477 = vmatpush1.xpose.msra.mxu0 %v388
        %478 = vmatprep.subr.mxu0 0.0
        %479 = vmatpush1.xpose.msra.mxu0 %v391
        %480 = vmatprep.subr.mxu0 0.0
        %481 = vmatpush1.xpose.msra.mxu0 %v394
        %482 = vmatprep.subr.mxu0 0.0
        %483 = vmatpush1.xpose.msra.mxu0 %v397
        %484 = vmatprep.subr.mxu0 0.0
        %485 = vmatpush1.xpose.msra.mxu0 %v400
        %486 = vmatprep.subr.mxu0 0.0
        %487 = vmatpush1.xpose.msra.mxu0 %v403
        %488 = vmatprep.subr.mxu0 0.0
        %489 = vmatpush1.xpose.msra.mxu0 %v406
        %490 = vmatprep.subr.mxu0 0.0
        %491 = vmatpush1.xpose.msra.mxu0 %v409
        %492 = vmatprep.subr.mxu0 0.0
        %493 = vmatpush1.xpose.msra.mxu0 %v412
        %494 = vmatprep.subr.mxu0 0.0
        %495 = vmatpush1.xpose.msra.mxu0 %v415
        %496 = vmatprep.subr.mxu0 0.0
        %497 = vmatpush1.xpose.msra.mxu0 %v418
        %498 = vmatprep.subr.mxu0 0.0
        %499 = vmatpush1.xpose.msra.mxu0 %v421
        %500 = vmatprep.subr.mxu0 0.0
        %501 = vmatpush1.xpose.msra.mxu0 %v424
        %502 = vmatprep.subr.mxu0 0.0
        %503 = vmatpush1.xpose.msra.mxu0 %v427
        %504 = vmatprep.subr.mxu0 0.0
        %505 = vmatpush1.xpose.msra.mxu0 %v430
        %506 = vmatprep.subr.mxu0 0.0
        %507 = vmatpush1.xpose.msra.mxu0 %v433
        %508 = vmatprep.subr.mxu0 0.0
        %509 = vmatpush1.xpose.msra.mxu0 %v436
        %510 = vmatprep.subr.mxu0 0.0
        %511 = vmatpush1.xpose.msra.mxu0 %v439
        %512 = vmatprep.subr.mxu0 0.0
        %513 = vmatpush1.xpose.msra.mxu0 %v442
        %514 = vmatprep.subr.mxu0 0.0
        %515 = vmatpush1.xpose.msra.mxu0 %v445
        %516 = vmatprep.subr.mxu0 0.0
        %517 = vmatpush1.xpose.msra.mxu0 %v448
        %518 = vmatprep.subr.mxu0 0.0
        %519 = vmatpush1.xpose.msra.mxu0 %v451
        %520 = vmatprep.subr.mxu0 0.0
        %521 = vmatpush1.xpose.msra.mxu0 %v454
        %522 = vmatprep.subr.mxu0 0.0
        %523 = vmatpush1.xpose.msra.mxu0 %v457
        %524 = vmatprep.subr.mxu0 0.0
        %525 = vmatpush1.xpose.msra.mxu0 %v460
        %526 = vmatprep.mubr.f32.mxu0 0.0
        %527 = vmatmul.mubr.f32.gmra.mrb[0].mxu0 %v343
        %v528 = vpop.f32.mrb[0].mxu0
        %v529 = vadd.f32 %v304, %v528
        %v530 = vpop.f32.mrb[0].mxu0
        %v531 = vadd.f32 %v304, %v530
        %532 = vmatprep.mubr.f32.mxu0 0.0
        %533 = vmatmul.mubr.f32.gmra.mrb[0].mxu0 %v346
        %v534 = vpop.f32.mrb[0].mxu0
        %v535 = vadd.f32 %v309, %v534
        %v536 = vpop.f32.mrb[0].mxu0
        %v537 = vadd.f32 %v309, %v536
        %538 = vmatprep.mubr.f32.mxu0 0.0
        %539 = vmatmul.mubr.f32.gmra.mrb[0].mxu0 %v349
        %v540 = vpop.f32.mrb[0].mxu0
        %v541 = vadd.f32 %v314, %v540
        %v542 = vpop.f32.mrb[0].mxu0
        %v543 = vadd.f32 %v314, %v542
        %544 = vmatprep.mubr.f32.mxu0 0.0
        %545 = vmatmul.mubr.f32.gmra.mrb[0].mxu0 %v352
        %v546 = vpop.f32.mrb[0].mxu0
        %v547 = vadd.f32 %v319, %v546
        %v548 = vpop.f32.mrb[0].mxu0
        %v549 = vadd.f32 %v319, %v548
        %550 = vmatprep.mubr.f32.mxu0 0.0
        %551 = vmatmul.mubr.f32.gmra.mrb[0].mxu0 %v355
        %v552 = vpop.f32.mrb[0].mxu0
        %v553 = vadd.f32 %v324, %v552
        %v554 = vpop.f32.mrb[0].mxu0
        %v555 = vadd.f32 %v324, %v554
        %556 = vmatprep.mubr.f32.mxu0 0.0
        %557 = vmatmul.mubr.f32.gmra.mrb[0].mxu0 %v358
        %v558 = vpop.f32.mrb[0].mxu0
        %v559 = vadd.f32 %v329, %v558
        %v560 = vpop.f32.mrb[0].mxu0
        %v561 = vadd.f32 %v329, %v560
        %562 = vmatprep.mubr.f32.mxu0 0.0
        %563 = vmatmul.mubr.f32.gmra.mrb[0].mxu0 %v361
        %v564 = vpop.f32.mrb[0].mxu0
        %v565 = vadd.f32 %v334, %v564
        %v566 = vpop.f32.mrb[0].mxu0
        %v567 = vadd.f32 %v334, %v566
        %568 = vmatprep.mubr.f32.mxu0 0.0
        %569 = vmatmul.mubr.f32.gmra.mrb[0].mxu0 %v364
        %v570 = vpop.f32.mrb[0].mxu0
        %v571 = vadd.f32 %v339, %v570
        %v572 = vpop.f32.mrb[0].mxu0
        %v573 = vadd.f32 %v339, %v572
        %574 = vdwg.mxu0
        %vm575 = vcmp.gt.f32.partialorder %v529, 0.0
        %vm576 = vcmp.gt.f32.partialorder %v531, 0.0
        %vm577 = vcmp.gt.f32.partialorder %v535, 0.0
        %vm578 = vcmp.gt.f32.partialorder %v537, 0.0
        %vm579 = vcmp.gt.f32.partialorder %v541, 0.0
        %vm580 = vcmp.gt.f32.partialorder %v543, 0.0
        %vm581 = vcmp.gt.f32.partialorder %v547, 0.0
        %vm582 = vcmp.gt.f32.partialorder %v549, 0.0
        %vm583 = vcmp.gt.f32.partialorder %v553, 0.0
        %vm584 = vcmp.gt.f32.partialorder %v555, 0.0
        %vm585 = vcmp.gt.f32.partialorder %v559, 0.0
        %vm586 = vcmp.gt.f32.partialorder %v561, 0.0
        %vm587 = vcmp.gt.f32.partialorder %v565, 0.0
        %vm588 = vcmp.gt.f32.partialorder %v567, 0.0
        %vm589 = vcmp.gt.f32.partialorder %v571, 0.0
        %vm590 = vcmp.gt.f32.partialorder %v573, 0.0
        %v591 = vmul.f32 %v529, 0.2
        %v592 = vmul.f32 %v531, 0.2
        %v593 = vmul.f32 %v535, 0.2
        %v594 = vmul.f32 %v537, 0.2
        %v595 = vmul.f32 %v541, 0.2
        %v596 = vmul.f32 %v543, 0.2
        %v597 = vmul.f32 %v547, 0.2
        %v598 = vmul.f32 %v549, 0.2
        %v599 = vmul.f32 %v553, 0.2
        %v600 = vmul.f32 %v555, 0.2
        %v601 = vmul.f32 %v559, 0.2
        %v602 = vmul.f32 %v561, 0.2
        %v603 = vmul.f32 %v565, 0.2
        %v604 = vmul.f32 %v567, 0.2
        %v605 = vmul.f32 %v571, 0.2
        %v606 = vmul.f32 %v573, 0.2
        %v607 = vsel %vm575, %v529, %v591
        %v608 = vsel %vm576, %v531, %v592
        %v609 = vsel %vm577, %v535, %v593
        %v610 = vsel %vm578, %v537, %v594
        %v611 = vsel %vm579, %v541, %v595
        %v612 = vsel %vm580, %v543, %v596
        %v613 = vsel %vm581, %v547, %v597
        %v614 = vsel %vm582, %v549, %v598
        %v615 = vsel %vm583, %v553, %v599
        %v616 = vsel %vm584, %v555, %v600
        %v617 = vsel %vm585, %v559, %v601
        %v618 = vsel %vm586, %v561, %v602
        %v619 = vsel %vm587, %v565, %v603
        %v620 = vsel %vm588, %v567, %v604
        %v621 = vsel %vm589, %v571, %v605
        %v622 = vsel %vm590, %v573, %v606
        %v623 = vld [vmem:[%s3] sm:$0xff]
        %v624 = vld [vmem:[%s3 + $0x8] sm:$0xff]
        %v625 = vld [vmem:[%s3 + $0x10] sm:$0xff]
        %v626 = vld [vmem:[%s3 + $0x18] sm:$0xff]
        %v627 = vld [vmem:[%s4] sm:$0xff]
        %v628 = vld [vmem:[%s4 + $0x8] sm:$0xff]
        %v629 = vld [vmem:[%s4 + $0x10] sm:$0xff]
        %v630 = vld [vmem:[%s4 + $0x18] sm:$0xff]
        %632 = vset.pattern.permute.xlu0 0
        %633 = vperm.xlu0 %632, %v627
        %v634 = vpop.permute.xlu0 %633
        %637 = vset.pattern.permute.xlu0 0
        %638 = vperm.xlu0 %637, %v628
        %v639 = vpop.permute.xlu0 %638
        %642 = vset.pattern.permute.xlu0 0
        %643 = vperm.xlu0 %642, %v629
        %v644 = vpop.permute.xlu0 %643
        %647 = vset.pattern.permute.xlu0 0
        %648 = vperm.xlu0 %647, %v630
        %v649 = vpop.permute.xlu0 %648
        %vm651 = vcmask 523264
        %v653 = vsel %vm651, %v623, 0
        %v656 = vsel %vm651, %v624, 0
        %v659 = vsel %vm651, %v625, 0
        %v662 = vsel %vm651, %v626, 0
        %664 = vmatprep.subr.mxu0 %v608
        %665 = vmatpush1.msra.mxu0 %v607
        %666 = vmatprep.subr.mxu0 %v610
        %667 = vmatpush1.msra.mxu0 %v609
        %668 = vmatprep.subr.mxu0 %v612
        %669 = vmatpush1.msra.mxu0 %v611
        %670 = vmatprep.subr.mxu0 %v614
        %671 = vmatpush1.msra.mxu0 %v613
        %672 = vmatprep.subr.mxu0 %v616
        %673 = vmatpush1.msra.mxu0 %v615
        %674 = vmatprep.subr.mxu0 %v618
        %675 = vmatpush1.msra.mxu0 %v617
        %676 = vmatprep.subr.mxu0 %v620
        %677 = vmatpush1.msra.mxu0 %v619
        %678 = vmatprep.subr.mxu0 %v622
        %679 = vmatpush1.msra.mxu0 %v621
        %680 = vmatprep.subr.mxu0 0.0
        %681 = vmatpush1.msra.mxu0 0.0
        %682 = vmatprep.subr.mxu0 0.0
        %683 = vmatpush1.msra.mxu0 0.0
        %684 = vmatprep.subr.mxu0 0.0
        %685 = vmatpush1.msra.mxu0 0.0
        %686 = vmatprep.subr.mxu0 0.0
        %687 = vmatpush1.msra.mxu0 0.0
        %688 = vmatprep.subr.mxu0 0.0
        %689 = vmatpush1.msra.mxu0 0.0
        %690 = vmatprep.subr.mxu0 0.0
        %691 = vmatpush1.msra.mxu0 0.0
        %692 = vmatprep.subr.mxu0 0.0
        %693 = vmatpush1.msra.mxu0 0.0
        %694 = vmatprep.subr.mxu0 0.0
        %695 = vmatpush1.msra.mxu0 0.0
        %696 = vmatprep.subr.mxu0 0.0
        %697 = vmatpush1.msra.mxu0 0.0
        %698 = vmatprep.subr.mxu0 0.0
        %699 = vmatpush1.msra.mxu0 0.0
        %700 = vmatprep.subr.mxu0 0.0
        %701 = vmatpush1.msra.mxu0 0.0
        %702 = vmatprep.subr.mxu0 0.0
        %703 = vmatpush1.msra.mxu0 0.0
        %704 = vmatprep.subr.mxu0 0.0
        %705 = vmatpush1.msra.mxu0 0.0
        %706 = vmatprep.subr.mxu0 0.0
        %707 = vmatpush1.msra.mxu0 0.0
        %708 = vmatprep.subr.mxu0 0.0
        %709 = vmatpush1.msra.mxu0 0.0
        %710 = vmatprep.subr.mxu0 0.0
        %711 = vmatpush1.msra.mxu0 0.0
        %712 = vmatprep.subr.mxu0 0.0
        %713 = vmatpush1.msra.mxu0 0.0
        %714 = vmatprep.subr.mxu0 0.0
        %715 = vmatpush1.msra.mxu0 0.0
        %716 = vmatprep.subr.mxu0 0.0
        %717 = vmatpush1.msra.mxu0 0.0
        %718 = vmatprep.subr.mxu0 0.0
        %719 = vmatpush1.msra.mxu0 0.0
        %720 = vmatprep.subr.mxu0 0.0
        %721 = vmatpush1.msra.mxu0 0.0
        %722 = vmatprep.subr.mxu0 0.0
        %723 = vmatpush1.msra.mxu0 0.0
        %724 = vmatprep.subr.mxu0 0.0
        %725 = vmatpush1.msra.mxu0 0.0
        %726 = vmatprep.subr.mxu0 0.0
        %727 = vmatpush1.msra.mxu0 0.0
        %728 = vmatprep.mubr.f32.mxu0 0.0
        %729 = vmatmul.mubr.f32.gmra.mrb[0].mxu0 %v653
        %v730 = vpop.f32.mrb[0].mxu0
        %v731 = vadd.f32 %v634, %v730
        %v732 = vpop.f32.mrb[0].mxu0
        %v733 = vadd.f32 %v634, %v732
        %734 = vmatprep.mubr.f32.mxu0 0.0
        %735 = vmatmul.mubr.f32.gmra.mrb[0].mxu0 %v656
        %v736 = vpop.f32.mrb[0].mxu0
        %v737 = vadd.f32 %v639, %v736
        %v738 = vpop.f32.mrb[0].mxu0
        %v739 = vadd.f32 %v639, %v738
        %740 = vmatprep.mubr.f32.mxu0 0.0
        %741 = vmatmul.mubr.f32.gmra.mrb[0].mxu0 %v659
        %v742 = vpop.f32.mrb[0].mxu0
        %v743 = vadd.f32 %v644, %v742
        %v744 = vpop.f32.mrb[0].mxu0
        %v745 = vadd.f32 %v644, %v744
        %746 = vmatprep.mubr.f32.mxu0 0.0
        %747 = vmatmul.mubr.f32.gmra.mrb[0].mxu0 %v662
        %v748 = vpop.f32.mrb[0].mxu0
        %v749 = vadd.f32 %v649, %v748
        %v750 = vpop.f32.mrb[0].mxu0
        %v751 = vadd.f32 %v649, %v750
        %752 = vdwg.mxu0
        %vm753 = vcmp.gt.f32.partialorder %v731, 0.0
        %vm754 = vcmp.gt.f32.partialorder %v733, 0.0
        %vm755 = vcmp.gt.f32.partialorder %v737, 0.0
        %vm756 = vcmp.gt.f32.partialorder %v739, 0.0
        %vm757 = vcmp.gt.f32.partialorder %v743, 0.0
        %vm758 = vcmp.gt.f32.partialorder %v745, 0.0
        %vm759 = vcmp.gt.f32.partialorder %v749, 0.0
        %vm760 = vcmp.gt.f32.partialorder %v751, 0.0
        %v761 = vmul.f32 %v731, 0.2
        %v762 = vmul.f32 %v733, 0.2
        %v763 = vmul.f32 %v737, 0.2
        %v764 = vmul.f32 %v739, 0.2
        %v765 = vmul.f32 %v743, 0.2
        %v766 = vmul.f32 %v745, 0.2
        %v767 = vmul.f32 %v749, 0.2
        %v768 = vmul.f32 %v751, 0.2
        %v769 = vsel %vm753, %v731, %v761
        %v770 = vsel %vm754, %v733, %v762
        %v771 = vsel %vm755, %v737, %v763
        %v772 = vsel %vm756, %v739, %v764
        %v773 = vsel %vm757, %v743, %v765
        %v774 = vsel %vm758, %v745, %v766
        %v775 = vsel %vm759, %v749, %v767
        %v776 = vsel %vm760, %v751, %v768
        %v777 = vld [vmem:[%s5] sm:$0xff]
        %v778 = vld [vmem:[%s5 + $0x8] sm:$0xff]
        %v779 = vld [vmem:[%s5 + $0x10] sm:$0xff]
        %v780 = vld [vmem:[%s5 + $0x18] sm:$0xff]
        %782 = vset.pattern.permute.xlu0 0
        %783 = vperm.xlu0 %782, %v777
        %v784 = vpop.permute.xlu0 %783
        %787 = vset.pattern.permute.xlu0 0
        %788 = vperm.xlu0 %787, %v778
        %v789 = vpop.permute.xlu0 %788
        %792 = vset.pattern.permute.xlu0 0
        %793 = vperm.xlu0 %792, %v779
        %v794 = vpop.permute.xlu0 %793
        %797 = vset.pattern.permute.xlu0 0
        %798 = vperm.xlu0 %797, %v780
        %v799 = vpop.permute.xlu0 %798
        %v801 = vmul.f32 %v769, %v784
        %v802 = vmul.f32 %v770, %v784
        %v803 = vmul.f32 %v771, %v789
        %v804 = vmul.f32 %v772, %v789
        %v805 = vmul.f32 %v773, %v794
        %v806 = vmul.f32 %v774, %v794
        %v807 = vmul.f32 %v775, %v799
        %v808 = vmul.f32 %v776, %v799
        %v809 = vadd.f32 %v801, %v803
        %v810 = vadd.f32 %v809, %v805
        %v811 = vadd.f32 %v810, %v807
        %v812 = vrot.slane %v811, 4
        %v813 = vadd.f32 %v811, %v812
        %v814 = vrot.slane %v813, 2
        %v815 = vadd.f32 %v813, %v814
        %v816 = vrot.slane %v815, 1
        %v817 = vadd.f32 %v815, %v816
        %v818 = vadd.f32 %v802, %v804
        %v819 = vadd.f32 %v818, %v806
        %v820 = vadd.f32 %v819, %v808
        %v821 = vrot.slane %v820, 4
        %v822 = vadd.f32 %v820, %v821
        %v823 = vrot.slane %v822, 2
        %v824 = vadd.f32 %v822, %v823
        %v825 = vrot.slane %v824, 1
        %v826 = vadd.f32 %v824, %v825
        %v829 = vcombine.low %v817, %v826
        %v831 = vunpack.c.l.s4 1966171168
        %v832 = vunpack.c.0.s8 %v831
        %v833 = vlaneseq
        %v834 = vshrl.u32 %v833, 7
        %v835 = vsub.s32 %v832, %v834
        %v836 = vrot.slane %v829, %v835
        %v838 = vunpack.c.l.s4 1966171168
        %v839 = vunpack.c.0.s8 %v838
        %v840 = vlaneseq
        %v841 = vshrl.u32 %v840, 7
        %v842 = vsub.s32 %v839, %v841
        %v843 = vrot.slane %v836, %v842
        %v845 = vlaneseq
        %vm846 = vcmp.ge.s32.totalorder %v845, 0
        %vm847 = vcmp.lt.s32.totalorder %v845, 256
        %vm848 = vmand %vm846, %vm847
        %849 = vst.msk [vmem:[%s245] sm:$0x3] %vm848, %v843
        %s850 = sand.u32 %s159, 1
        %s851 = scalar_lea.sflag [#allocation3], %s850
        %s852 = sand.u32 %s159, 1
        %s853 = smul.addr %s852, 2
        %s854 = scalar_lea.vmem [#allocation2], %s853
        // Predicated region
        $region45: #{tpu_custom_call.1} parent=43 // pred_check
          %p855 = pneg %p169
        $region46: #{tpu_custom_call.1} parent=43 // pred_check_branch
          %857 = sbr.rel (%p855) target = $region48
        $region47: #{tpu_custom_call.1} parent=43 // pred_region
          %s858 = smul.u32 2, %s20
          %s860 = ssub.s32 32, 32
          %861 = vsyncadd %s851, %s860
          %s862 = smul.addr %s858, 16
          %s863 = scalar_lea.hbm %s6, %s862
          %s865 = sshll.u32 %s854, 4
          %s866 = int_to_ptr.vmem [resolvable:$true] %s865
          %868 = dma.vmem_to_hbm [thread:$0]  %s866, 32, %s863, %s851
        $region48: #{tpu_custom_call.1} parent=43 // pred_fallthru
          _
      $region44: #{tpu_custom_call.1} parent=5 // pred_fallthru
        _
      %p869 = scmp.le.s32.totalorder 2, %s15
      // Predicated region
      $region49: #{tpu_custom_call.1} parent=5 // pred_check
        %p870 = pneg %p869
      $region50: #{tpu_custom_call.1} parent=5 // pred_check_branch
        %872 = sbr.rel (%p870) target = $region52
      $region51: #{tpu_custom_call.1} parent=5 // pred_region
        %s873 = ssub.s32 %s15, 2
        // Predicated region
        $region53: #{tpu_custom_call.1} parent=51 // pred_check
          %p874 = pneg %p175
        $region54: #{tpu_custom_call.1} parent=51 // pred_check_branch
          %876 = sbr.rel (%p874) target = $region56
        $region55: #{tpu_custom_call.1} parent=51 // pred_region
          %s877 = sand.u32 %s160, 1
          %s878 = scalar_lea.sflag [#allocation3], %s877
          %s879 = sand.u32 %s160, 1
          %s880 = smul.addr %s879, 2
          %s881 = scalar_lea.vmem [#allocation2], %s880
          %882 = dma.done %s878, 32
        $region56: #{tpu_custom_call.1} parent=51 // pred_fallthru
          _
      $region52: #{tpu_custom_call.1} parent=5 // pred_fallthru
        _
    $region6: #{tpu_custom_call.1} parent=1 // loop_footer
      %s19 = sadd.s32 1, %s15
    $region7: #{tpu_custom_call.1} parent=1 // loop_footer_branch
      %14 = sbr.rel target = $region3
    $region8: #{tpu_custom_call.1} parent=1 // loop_exit
      _
    %883 = vsyncpa [#allocation3], 1
    %s884 = scalar_lea.sflag [#allocation3], 1
    %885 = vsyncpa %s884, 1

</llo_original>
